<compile_context>
chip_gen: v7x
topology: tpu7x:2x2x1
jax: 0.10.0
libtpu: 0.0.40
codegen_flags: <defaults>
</compile_context>

<pallas_src>
import jax
import jax.numpy as jnp
from jax.experimental import pallas as pl
from jax.experimental.pallas import tpu as pltpu


def _round_up(x, m):
    return ((x + m - 1) // m) * m


def _value_kernel(x_ref, wx_ref, w1h_ref, b0_ref, b1_ref,
                  w2h_ref, w2x_ref, b2_ref, o_ref):
    H = b0_ref.shape[-1]

    x = x_ref[...]                                      # (TB, S) f32
    x_bf = x.astype(jnp.bfloat16)

    # x-side projection: xp = x @ [W0 | W1x]  -> (TB, 2H), f32 accumulation.
    # (K=16: push count identical to two separate N=256 matmuls; kept fused
    # purely for code simplicity.)
    xp = jnp.dot(x_bf, wx_ref[...], preferred_element_type=jnp.float32)

    # Layer 0: relu(x @ W0 + b0)
    h0 = jnp.maximum(xp[:, :H] + b0_ref[...], 0.0)

    # Layer 1: relu(h0 @ W1h + x @ W1x + b1)
    h1 = jnp.dot(h0.astype(jnp.bfloat16), w1h_ref[...],
                 preferred_element_type=jnp.float32)
    h1 = jnp.maximum(h1 + xp[:, H:] + b1_ref[...], 0.0)

    # Output layer (out_dim == 1): VPU broadcast-mul + lane reduce instead of
    # two N=1 MXU matmuls.
    v = (jnp.sum(h1 * w2h_ref[...], axis=-1, keepdims=True)
         + jnp.sum(x * w2x_ref[...], axis=-1, keepdims=True)
         + b2_ref[...])

    o_ref[...] = v.astype(o_ref.dtype)


def value_forward(state, packed, *, tile_b=1024, min_grid_steps=2,
                  vmem_limit_bytes=32 * 1024 * 1024):
    """Run the Value network on `state` of shape (B, state_dim)."""
    B, S = state.shape
    H = packed["b0"].shape[-1]

    # Pick the batch tile:
    #   * multiple of 8 (sublane granularity) unless B itself is tiny,
    #   * capped so the grid has >= min_grid_steps steps (megacore on v7x),
    #   * capped at 2048 so padding-aware VMEM use stays inside the limit on
    #     v7x's 64 MiB/TC.
    if B <= 8:
        tb = B
    else:
        cap = _round_up(pl.cdiv(B, max(1, min_grid_steps)), 8)
        tb = max(8, min(_round_up(min(tile_b, 2048), 8), cap))
    grid = (pl.cdiv(B, tb),)

    resident = lambda i: (0, 0)   # weights/biases: fetched once, stay in VMEM

    flops = 2 * B * (S * 2 * H + H * H + H + S)
    bytes_accessed = (B * S * 4 + B * 4                  # x in, v out
                      + (S * 2 * H + H * H) * 2          # bf16 weights
                      + (2 * H + H + S + 1) * 4)         # f32 biases / rows

    return pl.pallas_call(
        _value_kernel,
        out_shape=jax.ShapeDtypeStruct((B, 1), jnp.float32),
        grid=grid,
        in_specs=[
            pl.BlockSpec((tb, S), lambda i: (i, 0)),     # x tile (streamed)
            pl.BlockSpec((S, 2 * H), resident),          # Wx = [W0 | W1x] bf16
            pl.BlockSpec((H, H), resident),              # W1h            bf16
            pl.BlockSpec((1, H), resident),              # b0             f32
            pl.BlockSpec((1, H), resident),              # b1             f32
            pl.BlockSpec((1, H), resident),              # w2 (h-part)    f32
            pl.BlockSpec((1, S), resident),              # w2 (x-part)    f32
            pl.BlockSpec((1, 1), resident),              # b2             f32
        ],
        out_specs=pl.BlockSpec((tb, 1), lambda i: (i, 0)),
        compiler_params=pltpu.CompilerParams(
            dimension_semantics=("parallel",),
            vmem_limit_bytes=vmem_limit_bytes,
        ),
        cost_estimate=pl.CostEstimate(
            flops=flops, transcendentals=0, bytes_accessed=bytes_accessed),
    )(state,
      packed["wx"], packed["w1h"], packed["b0"], packed["b1"],
      packed["w2h"], packed["w2x"], packed["b2"])


def init_raw_params(key, state_dim, hidden=(256, 256)):
    """Deterministic init mimicking torch.nn.Linear default (U[-1/sqrt(fan_in), +])."""
    h0u, h1u = hidden
    ks = jax.random.split(key, 6)

    def unif(k, shape, fan_in):
        bound = 1.0 / jnp.sqrt(jnp.float32(fan_in))
        return jax.random.uniform(k, shape, jnp.float32, -bound, bound)

    w0 = unif(ks[0], (state_dim, h0u), state_dim)        # (in, out) layout
    b0 = unif(ks[1], (1, h0u), state_dim)
    fan1 = h0u + state_dim
    w1 = unif(ks[2], (fan1, h1u), fan1)
    b1 = unif(ks[3], (1, h1u), fan1)
    fan2 = h1u + state_dim
    w2 = unif(ks[4], (fan2, 1), fan2)
    b2 = unif(ks[5], (1, 1), fan2)
    return {"w0": w0, "b0": b0, "w1": w1, "b1": b1, "w2": w2, "b2": b2}


def pack_params(raw, state_dim, hidden=(256, 256)):
    """Pack raw Linear weights into the fused/split layout the kernel expects."""
    H0, H1 = hidden
    w1h, w1x = raw["w1"][:H0, :], raw["w1"][H0:, :]
    w2h, w2x = raw["w2"][:H1, :], raw["w2"][H1:, :]
    return {
        "wx": jnp.concatenate([raw["w0"], w1x], axis=1).astype(jnp.bfloat16),
        "w1h": w1h.astype(jnp.bfloat16),
        "b0": raw["b0"],
        "b1": raw["b1"],
        "w2h": w2h.T,            # (1, H1)        f32
        "w2x": w2x.T,            # (1, state_dim) f32
        "b2": raw["b2"],         # (1, 1)         f32
    }


def value_reference_f32(x, raw):
    """Pure-JAX f32 reference matching the PyTorch forward exactly."""
    h = jnp.maximum(x @ raw["w0"] + raw["b0"], 0.0)
    h = jnp.concatenate([h, x], axis=1)
    h = jnp.maximum(h @ raw["w1"] + raw["b1"], 0.0)
    h = jnp.concatenate([h, x], axis=1)
    return h @ raw["w2"] + raw["b2"]


def value_reference_matched(x, raw, hidden=(256, 256)):
    """Same math as the kernel (bf16 matmul operands, f32 accumulation)."""
    H0, H1 = hidden
    xb = x.astype(jnp.bfloat16)
    w0 = raw["w0"].astype(jnp.bfloat16)
    w1h = raw["w1"][:H0, :].astype(jnp.bfloat16)
    w1x = raw["w1"][H0:, :].astype(jnp.bfloat16)
    w2h, w2x = raw["w2"][:H1, :], raw["w2"][H1:, :]
    h0 = jnp.maximum(
        jnp.dot(xb, w0, preferred_element_type=jnp.float32) + raw["b0"], 0.0)
    h1 = jnp.maximum(
        jnp.dot(h0.astype(jnp.bfloat16), w1h, preferred_element_type=jnp.float32)
        + jnp.dot(xb, w1x, preferred_element_type=jnp.float32)
        + raw["b1"], 0.0)
    return h1 @ w2h + x @ w2x + raw["b2"]


if __name__ == "__main__":
    key = jax.random.PRNGKey(0)
    k_param, k_small, k_big = jax.random.split(key, 3)

    STATE_DIM = 16
    HIDDEN = (256, 256)

    raw = init_raw_params(k_param, STATE_DIM, HIDDEN)
    packed = pack_params(raw, STATE_DIM, HIDDEN)

    # Small shape (single grid step, tb == B).
    x_small = jax.random.normal(k_small, (8, STATE_DIM), jnp.float32)
    v_small = jax.block_until_ready(value_forward(x_small, packed))

    # Larger batch: defaults give grid=(2,) (megacore split), and an explicit
    # small tile exercises multi-step streaming with resident weights.
    x_big = jax.random.normal(k_big, (512, STATE_DIM), jnp.float32)
    v_big = jax.block_until_ready(value_forward(x_big, packed))
    v_big_t128 = jax.block_until_ready(value_forward(x_big, packed, tile_b=128))

    checks = ((x_small, v_small), (x_big, v_big), (x_big, v_big_t128))
    for x, v in checks:
        assert v.shape == (x.shape[0], 1), v.shape
        v_match = value_reference_matched(x, raw, HIDDEN)
        err_match = float(jnp.max(jnp.abs(v - v_match)))
        assert err_match < 1e-3, f"mismatch vs matched-precision ref: {err_match}"
        v_f32 = value_reference_f32(x, raw)
        err_f32 = float(jnp.max(jnp.abs(v - v_f32)))
        assert err_f32 < 5e-2, f"mismatch vs f32 ref: {err_f32}"

    print("KERNEL_OK")
</pallas_src>

<mosaic_0001>
module attributes {stable_mosaic.version = 11 : i64} {
  func.func @_value_kernel(%arg0: i32, %arg1: memref<8x16xf32, #tpu.memory_space<vmem>>, %arg2: memref<16x512xbf16, #tpu.memory_space<vmem>>, %arg3: memref<256x256xbf16, #tpu.memory_space<vmem>>, %arg4: memref<1x256xf32, #tpu.memory_space<vmem>>, %arg5: memref<1x256xf32, #tpu.memory_space<vmem>>, %arg6: memref<1x256xf32, #tpu.memory_space<vmem>>, %arg7: memref<1x16xf32, #tpu.memory_space<vmem>>, %arg8: memref<1x1xf32, #tpu.memory_space<vmem>>, %arg9: memref<8x1xf32, #tpu.memory_space<vmem>>) attributes {dimension_semantics = [#tpu.dimension_semantics<parallel>], iteration_bounds = array<i64: 1>, scalar_prefetch = 0 : i64, scratch_operands = 0 : i64, tpu.core_type = #tpu.core_type<tc>, window_params = [{transform_indices = @transform_0, window_bounds = array<i64: 8, 16>}, {pipeline_mode = #tpu.pipeline_mode<synchronous>, transform_indices = @transform_1, window_bounds = array<i64: 16, 512>}, {pipeline_mode = #tpu.pipeline_mode<synchronous>, transform_indices = @transform_2, window_bounds = array<i64: 256, 256>}, {pipeline_mode = #tpu.pipeline_mode<synchronous>, transform_indices = @transform_3, window_bounds = array<i64: 1, 256>}, {pipeline_mode = #tpu.pipeline_mode<synchronous>, transform_indices = @transform_4, window_bounds = array<i64: 1, 256>}, {pipeline_mode = #tpu.pipeline_mode<synchronous>, transform_indices = @transform_5, window_bounds = array<i64: 1, 256>}, {pipeline_mode = #tpu.pipeline_mode<synchronous>, transform_indices = @transform_6, window_bounds = array<i64: 1, 16>}, {pipeline_mode = #tpu.pipeline_mode<synchronous>, transform_indices = @transform_7, window_bounds = array<i64: 1, 1>}, {transform_indices = @transform_8, window_bounds = array<i64: 8, 1>}]} {
    %c0 = arith.constant 0 : index
    %c0_0 = arith.constant 0 : index
    %0 = vector.load %arg1[%c0, %c0_0] : memref<8x16xf32, #tpu.memory_space<vmem>>, vector<8x16xf32>
    %1 = arith.truncf %0 : vector<8x16xf32> to vector<8x16xbf16>
    %c0_1 = arith.constant 0 : index
    %c0_2 = arith.constant 0 : index
    %2 = vector.load %arg2[%c0_1, %c0_2] : memref<16x512xbf16, #tpu.memory_space<vmem>>, vector<16x512xbf16>
    %cst = arith.constant dense<0.000000e+00> : vector<8x512xf32>
    %3 = tpu.matmul %1, %2, %cst {dimension_numbers = #tpu.dot_dimension_numbers<[1], [0], [0], [1], [0, 0, 1, 1], [], []>} : vector<8x16xbf16>, vector<16x512xbf16>, vector<8x512xf32> -> vector<8x512xf32>
    %4 = vector.extract_strided_slice %3 {offsets = [0, 0], sizes = [8, 256], strides = [1, 1]} : vector<8x512xf32> to vector<8x256xf32>
    %c0_3 = arith.constant 0 : index
    %c0_4 = arith.constant 0 : index
    %5 = vector.load %arg4[%c0_3, %c0_4] : memref<1x256xf32, #tpu.memory_space<vmem>>, vector<1x256xf32>
    %6 = vector.broadcast %5 : vector<1x256xf32> to vector<8x256xf32>
    %7 = arith.addf %4, %6 : vector<8x256xf32>
    %cst_5 = arith.constant 0.000000e+00 : f32
    %8 = vector.broadcast %cst_5 : f32 to vector<8x256xf32>
    %9 = arith.maximumf %7, %8 : vector<8x256xf32>
    %10 = arith.truncf %9 : vector<8x256xf32> to vector<8x256xbf16>
    %c0_6 = arith.constant 0 : index
    %c0_7 = arith.constant 0 : index
    %11 = vector.load %arg3[%c0_6, %c0_7] : memref<256x256xbf16, #tpu.memory_space<vmem>>, vector<256x256xbf16>
    %cst_8 = arith.constant dense<0.000000e+00> : vector<8x256xf32>
    %12 = tpu.matmul %10, %11, %cst_8 {dimension_numbers = #tpu.dot_dimension_numbers<[1], [0], [0], [1], [0, 0, 1, 1], [], []>} : vector<8x256xbf16>, vector<256x256xbf16>, vector<8x256xf32> -> vector<8x256xf32>
    %13 = vector.extract_strided_slice %3 {offsets = [0, 256], sizes = [8, 256], strides = [1, 1]} : vector<8x512xf32> to vector<8x256xf32>
    %14 = arith.addf %12, %13 : vector<8x256xf32>
    %c0_9 = arith.constant 0 : index
    %c0_10 = arith.constant 0 : index
    %15 = vector.load %arg5[%c0_9, %c0_10] : memref<1x256xf32, #tpu.memory_space<vmem>>, vector<1x256xf32>
    %16 = vector.broadcast %15 : vector<1x256xf32> to vector<8x256xf32>
    %17 = arith.addf %14, %16 : vector<8x256xf32>
    %cst_11 = arith.constant 0.000000e+00 : f32
    %18 = vector.broadcast %cst_11 : f32 to vector<8x256xf32>
    %19 = arith.maximumf %17, %18 : vector<8x256xf32>
    %c0_12 = arith.constant 0 : index
    %c0_13 = arith.constant 0 : index
    %20 = vector.load %arg6[%c0_12, %c0_13] : memref<1x256xf32, #tpu.memory_space<vmem>>, vector<1x256xf32>
    %21 = vector.broadcast %20 : vector<1x256xf32> to vector<8x256xf32>
    %22 = arith.mulf %19, %21 : vector<8x256xf32>
    %cst_14 = arith.constant dense<0.000000e+00> : vector<8xf32>
    %23 = vector.multi_reduction <add>, %22, %cst_14 [1] : vector<8x256xf32> to vector<8xf32>
    %24 = vector.shape_cast %23 : vector<8xf32> to vector<8x1xf32>
    %c0_15 = arith.constant 0 : index
    %c0_16 = arith.constant 0 : index
    %25 = vector.load %arg7[%c0_15, %c0_16] : memref<1x16xf32, #tpu.memory_space<vmem>>, vector<1x16xf32>
    %26 = vector.broadcast %25 : vector<1x16xf32> to vector<8x16xf32>
    %27 = arith.mulf %0, %26 : vector<8x16xf32>
    %cst_17 = arith.constant dense<0.000000e+00> : vector<8xf32>
    %28 = vector.multi_reduction <add>, %27, %cst_17 [1] : vector<8x16xf32> to vector<8xf32>
    %29 = vector.shape_cast %28 : vector<8xf32> to vector<8x1xf32>
    %30 = arith.addf %24, %29 : vector<8x1xf32>
    %c0_18 = arith.constant 0 : index
    %c0_19 = arith.constant 0 : index
    %31 = vector.load %arg8[%c0_18, %c0_19] : memref<1x1xf32, #tpu.memory_space<vmem>>, vector<1x1xf32>
    %32 = vector.broadcast %31 : vector<1x1xf32> to vector<8x1xf32>
    %33 = arith.addf %30, %32 : vector<8x1xf32>
    %c0_20 = arith.constant 0 : index
    %c0_21 = arith.constant 0 : index
    %34 = vector.load %arg9[%c0_20, %c0_21] : memref<8x1xf32, #tpu.memory_space<vmem>>, vector<8x1xf32>
    tpu.vector_store %arg9[%c0_20, %c0_21], %33 {strides = array<i32>} : memref<8x1xf32, #tpu.memory_space<vmem>>, vector<8x1xf32>,
    return
  }
  func.func @transform_0(%arg0: i32) -> (i32, i32) {
    %c0_i32 = arith.constant 0 : i32
    %c0_i32_0 = arith.constant 0 : i32
    return %arg0, %c0_i32 : i32, i32
  }
  func.func @transform_1(%arg0: i32) -> (i32, i32) {
    %c0_i32 = arith.constant 0 : i32
    %c0_i32_0 = arith.constant 0 : i32
    %c0_i32_1 = arith.constant 0 : i32
    return %c0_i32, %c0_i32_0 : i32, i32
  }
  func.func @transform_2(%arg0: i32) -> (i32, i32) {
    %c0_i32 = arith.constant 0 : i32
    %c0_i32_0 = arith.constant 0 : i32
    %c0_i32_1 = arith.constant 0 : i32
    return %c0_i32, %c0_i32_0 : i32, i32
  }
  func.func @transform_3(%arg0: i32) -> (i32, i32) {
    %c0_i32 = arith.constant 0 : i32
    %c0_i32_0 = arith.constant 0 : i32
    %c0_i32_1 = arith.constant 0 : i32
    return %c0_i32, %c0_i32_0 : i32, i32
  }
  func.func @transform_4(%arg0: i32) -> (i32, i32) {
    %c0_i32 = arith.constant 0 : i32
    %c0_i32_0 = arith.constant 0 : i32
    %c0_i32_1 = arith.constant 0 : i32
    return %c0_i32, %c0_i32_0 : i32, i32
  }
  func.func @transform_5(%arg0: i32) -> (i32, i32) {
    %c0_i32 = arith.constant 0 : i32
    %c0_i32_0 = arith.constant 0 : i32
    %c0_i32_1 = arith.constant 0 : i32
    return %c0_i32, %c0_i32_0 : i32, i32
  }
  func.func @transform_6(%arg0: i32) -> (i32, i32) {
    %c0_i32 = arith.constant 0 : i32
    %c0_i32_0 = arith.constant 0 : i32
    %c0_i32_1 = arith.constant 0 : i32
    return %c0_i32, %c0_i32_0 : i32, i32
  }
  func.func @transform_7(%arg0: i32) -> (i32, i32) {
    %c0_i32 = arith.constant 0 : i32
    %c0_i32_0 = arith.constant 0 : i32
    %c0_i32_1 = arith.constant 0 : i32
    return %c0_i32, %c0_i32_0 : i32, i32
  }
  func.func @transform_8(%arg0: i32) -> (i32, i32) {
    %c0_i32 = arith.constant 0 : i32
    %c0_i32_0 = arith.constant 0 : i32
    return %arg0, %c0_i32 : i32, i32
  }
}

</mosaic_0001>

<llo_original>
// kernel: tpu_custom_call.1
$region0: #{tpu_custom_call.1}
  #allocation0 [shape = 'u32[]', space=smem, size = 0x4, offset = 0x4, fixed_abs, tag = 'smem constant byte address 0x4 - core index']
  #allocation1 [shape = 'u32[144,128]{1,0:T(1,128)}', space=vmem, size = 0x12000, scoped, tag = 'internal scratch']
  #allocation2 [shape = 'f32[1,1]{1,0:T(1,128)S(1)}', space=vmem, size = 0x200, scoped, tag = 'scoped memory for tpu_custom_call.1']
  %s0 = inlined_call_operand.hbm [shape: f32[8,16], index: 0, kind: input, shape index: {}]
  %s1 = inlined_call_operand.hbm [shape: bf16[16,512], index: 1, kind: input, shape index: {}]
  %s2 = inlined_call_operand.hbm [shape: bf16[256,256], index: 2, kind: input, shape index: {}]
  %s3 = inlined_call_operand.vmem [shape: f32[1,256], index: 3, kind: input, shape index: {}]
  %s4 = inlined_call_operand.vmem [shape: f32[1,256], index: 4, kind: input, shape index: {}]
  %s5 = inlined_call_operand.vmem [shape: f32[1,256], index: 5, kind: input, shape index: {}]
  %s6 = inlined_call_operand.vmem [shape: f32[1,16], index: 6, kind: input, shape index: {}]
  %s7 = inlined_call_operand.<no memory space> [shape: f32[1,1], index: 7, kind: input, shape index: {}]
  %s8 = inlined_call_operand.vmem [shape: f32[8,1], index: 8, kind: output, shape index: {}]
  %s9 = sld [smem:[#allocation0]]
  $region54: #{tpu_custom_call.1} parent=0
    _
  %s11 = ssub.s32 1, %s9
  %s12 = scalar_select 0, %s11, %s9
  %v13 = vstv %s7
  %14 = vst [vmem:[#allocation2] sm:$0x1] %v13
  $region1: #{tpu_custom_call.1} parent=0
    #allocation3 [shape = 'u8[4096]{0}', space=vmem, size = 0x1000, scoped, tag = 'input window, operand 0, single buffered']
    #allocation4 [shape = 's32[1]{0}', space=sflag, size = 0x4, scoped, tag = 'scoped memory for tpu_custom_call.1']
    #allocation5 [shape = 'u8[16384]{0}', space=vmem, size = 0x4000, scoped, tag = 'input window, operand 1, single buffered']
    #allocation6 [shape = 's32[1]{0}', space=sflag, size = 0x4, scoped, tag = 'scoped memory for tpu_custom_call.1']
    #allocation7 [shape = 'u8[131072]{0}', space=vmem, size = 0x20000, scoped, tag = 'input window, operand 2, single buffered']
    %15 = vsyncpa [#allocation4], 0
    %16 = vsyncpa [#allocation6], 0
    // Predicated region
    $region2: #{tpu_custom_call.1} parent=1 // pred_check
      _
    $region3: #{tpu_custom_call.1} parent=1 // pred_check_branch
      %18 = sbr.rel (0) target = $region5
    $region4: #{tpu_custom_call.1} parent=1 // pred_region
      %s20 = ssub.s32 128, 128
      %21 = vsyncadd [#allocation4], %s20
      %s23 = sshll.u32 [#allocation3], 4
      %s24 = int_to_ptr.vmem [resolvable:$true] %s23
      %26 = dma.hbm_to_vmem [thread:$0]  %s0, 128, %s24, [#allocation4]
    $region5: #{tpu_custom_call.1} parent=1 // pred_fallthru
      _
    // Predicated region
    $region6: #{tpu_custom_call.1} parent=1 // pred_check
      _
    $region7: #{tpu_custom_call.1} parent=1 // pred_check_branch
      %28 = sbr.rel (0) target = $region9
    $region8: #{tpu_custom_call.1} parent=1 // pred_region
      %s30 = ssub.s32 512, 512
      %31 = vsyncadd [#allocation6], %s30
      %s32 = sshll.u32 [#allocation5], 4
      %s33 = int_to_ptr.vmem [resolvable:$true] %s32
      %38 = dma.hbm_to_vmem [thread:$0]  %s1, 512, %s33, [#allocation6], 256, 256, 16
    $region9: #{tpu_custom_call.1} parent=1 // pred_fallthru
      _
    // Predicated region
    $region10: #{tpu_custom_call.1} parent=1 // pred_check
      _
    $region11: #{tpu_custom_call.1} parent=1 // pred_check_branch
      %40 = sbr.rel (0) target = $region13
    $region12: #{tpu_custom_call.1} parent=1 // pred_region
      %s42 = ssub.s32 4096, 4096
      %43 = vsyncadd [#allocation6], %s42
      %s44 = sshll.u32 [#allocation7], 4
      %s45 = int_to_ptr.vmem [resolvable:$true] %s44
      %50 = dma.hbm_to_vmem [thread:$0]  %s2, 4096, %s45, [#allocation6], 128, 128, 8
    $region13: #{tpu_custom_call.1} parent=1 // pred_fallthru
      _
    // Predicated region
    $region14: #{tpu_custom_call.1} parent=1 // pred_check
      _
    $region15: #{tpu_custom_call.1} parent=1 // pred_check_branch
      %52 = sbr.rel (0) target = $region17
    $region16: #{tpu_custom_call.1} parent=1 // pred_region
      _
    $region17: #{tpu_custom_call.1} parent=1 // pred_fallthru
      _
    // Predicated region
    $region18: #{tpu_custom_call.1} parent=1 // pred_check
      _
    $region19: #{tpu_custom_call.1} parent=1 // pred_check_branch
      %54 = sbr.rel (0) target = $region21
    $region20: #{tpu_custom_call.1} parent=1 // pred_region
      _
    $region21: #{tpu_custom_call.1} parent=1 // pred_fallthru
      _
    // Predicated region
    $region22: #{tpu_custom_call.1} parent=1 // pred_check
      _
    $region23: #{tpu_custom_call.1} parent=1 // pred_check_branch
      %56 = sbr.rel (0) target = $region25
    $region24: #{tpu_custom_call.1} parent=1 // pred_region
      _
    $region25: #{tpu_custom_call.1} parent=1 // pred_fallthru
      _
    // Predicated region
    $region26: #{tpu_custom_call.1} parent=1 // pred_check
      _
    $region27: #{tpu_custom_call.1} parent=1 // pred_check_branch
      %58 = sbr.rel (0) target = $region29
    $region28: #{tpu_custom_call.1} parent=1 // pred_region
      _
    $region29: #{tpu_custom_call.1} parent=1 // pred_fallthru
      _
    // Predicated region
    $region30: #{tpu_custom_call.1} parent=1 // pred_check
      _
    $region31: #{tpu_custom_call.1} parent=1 // pred_check_branch
      %60 = sbr.rel (0) target = $region33
    $region32: #{tpu_custom_call.1} parent=1 // pred_region
      _
    $region33: #{tpu_custom_call.1} parent=1 // pred_fallthru
      _
    // Predicated region
    $region34: #{tpu_custom_call.1} parent=1 // pred_check
      _
    $region35: #{tpu_custom_call.1} parent=1 // pred_check_branch
      %62 = sbr.rel (0) target = $region37
    $region36: #{tpu_custom_call.1} parent=1 // pred_region
      %63 = dma.done [#allocation4], 128
    $region37: #{tpu_custom_call.1} parent=1 // pred_fallthru
      _
    // Predicated region
    $region38: #{tpu_custom_call.1} parent=1 // pred_check
      _
    $region39: #{tpu_custom_call.1} parent=1 // pred_check_branch
      %65 = sbr.rel (0) target = $region41
    $region40: #{tpu_custom_call.1} parent=1 // pred_region
      %66 = dma.done [#allocation6], 512
    $region41: #{tpu_custom_call.1} parent=1 // pred_fallthru
      _
    // Predicated region
    $region42: #{tpu_custom_call.1} parent=1 // pred_check
      _
    $region43: #{tpu_custom_call.1} parent=1 // pred_check_branch
      %68 = sbr.rel (0) target = $region45
    $region44: #{tpu_custom_call.1} parent=1 // pred_region
      %69 = dma.done [#allocation6], 4096
    $region45: #{tpu_custom_call.1} parent=1 // pred_fallthru
      _
    %v71 = vld [vmem:[#allocation3] sm:$0xff]
    %v72 = vpack.c.bf16 %v71, %v71
    %v73 = vld [vmem:[#allocation5] sm:$0xff]
    %v74 = vld [vmem:[#allocation5 + $0x8] sm:$0xff]
    %v75 = vld [vmem:[#allocation5 + $0x10] sm:$0xff]
    %v76 = vld [vmem:[#allocation5 + $0x18] sm:$0xff]
    %v81 = vunpack.c.l.b16 %v73
    %v82 = vunpack.c.h.b16 %v73
    %v83 = vunpack.c.l.b16 %v74
    %v84 = vunpack.c.h.b16 %v74
    %v85 = vunpack.c.l.b16 %v75
    %v86 = vunpack.c.h.b16 %v75
    %v87 = vunpack.c.l.b16 %v76
    %v88 = vunpack.c.h.b16 %v76
    %v89 = vpack.c.b16 %v85, %v81
    %v90 = vpack.c.b16 %v86, %v82
    %v91 = vpack.c.b16 %v87, %v83
    %v92 = vpack.c.b16 %v88, %v84
    %vm97 = vcmask 130048
    %v99 = vsel %vm97, %v72, 0
    %101 = vmatprep.subr.bf16.mxu0 %v90
    %102 = vmatpush1.bf16.msra.mxu0 %v89
    %103 = vmatprep.subr.bf16.mxu0 0
    %104 = vmatpush1.bf16.msra.mxu0 0
    %105 = vmatprep.subr.bf16.mxu0 0
    %106 = vmatpush1.bf16.msra.mxu0 0
    %107 = vmatprep.subr.bf16.mxu0 0
    %108 = vmatpush1.bf16.msra.mxu0 0
    %109 = vmatprep.subr.bf16.mxu0 0
    %110 = vmatpush1.bf16.msra.mxu0 0
    %111 = vmatprep.subr.bf16.mxu0 0
    %112 = vmatpush1.bf16.msra.mxu0 0
    %113 = vmatprep.subr.bf16.mxu0 0
    %114 = vmatpush1.bf16.msra.mxu0 0
    %115 = vmatprep.subr.bf16.mxu0 0
    %116 = vmatpush1.bf16.msra.mxu0 0
    %117 = vmatprep.subr.bf16.mxu0 0
    %118 = vmatpush1.bf16.msra.mxu0 0
    %119 = vmatprep.subr.bf16.mxu0 0
    %120 = vmatpush1.bf16.msra.mxu0 0
    %121 = vmatprep.subr.bf16.mxu0 0
    %122 = vmatpush1.bf16.msra.mxu0 0
    %123 = vmatprep.subr.bf16.mxu0 0
    %124 = vmatpush1.bf16.msra.mxu0 0
    %125 = vmatprep.subr.bf16.mxu0 0
    %126 = vmatpush1.bf16.msra.mxu0 0
    %127 = vmatprep.subr.bf16.mxu0 0
    %128 = vmatpush1.bf16.msra.mxu0 0
    %129 = vmatprep.subr.bf16.mxu0 0
    %130 = vmatpush1.bf16.msra.mxu0 0
    %131 = vmatprep.subr.bf16.mxu0 0
    %132 = vmatpush1.bf16.msra.mxu0 0
    %133 = vmatprep.mubr.bf16.mxu0 0
    %134 = vmatmul.mubr.bf16.gmra.mrb[0].mxu0 %v99
    %v135 = vpop.f32.mrb[0].mxu0
    %v136 = vadd.f32 0.0, %v135
    %v137 = vpop.f32.mrb[0].mxu0
    %v138 = vadd.f32 0.0, %v137
    %v139 = vpop.f32.mrb[0].mxu0
    %v140 = vpop.f32.mrb[0].mxu0
    %141 = vdwg.mxu0
    %142 = vmatprep.subr.bf16.mxu0 %v92
    %143 = vmatpush1.bf16.msra.mxu0 %v91
    %144 = vmatprep.subr.bf16.mxu0 0
    %145 = vmatpush1.bf16.msra.mxu0 0
    %146 = vmatprep.subr.bf16.mxu0 0
    %147 = vmatpush1.bf16.msra.mxu0 0
    %148 = vmatprep.subr.bf16.mxu0 0
    %149 = vmatpush1.bf16.msra.mxu0 0
    %150 = vmatprep.subr.bf16.mxu0 0
    %151 = vmatpush1.bf16.msra.mxu0 0
    %152 = vmatprep.subr.bf16.mxu0 0
    %153 = vmatpush1.bf16.msra.mxu0 0
    %154 = vmatprep.subr.bf16.mxu0 0
    %155 = vmatpush1.bf16.msra.mxu0 0
    %156 = vmatprep.subr.bf16.mxu0 0
    %157 = vmatpush1.bf16.msra.mxu0 0
    %158 = vmatprep.subr.bf16.mxu0 0
    %159 = vmatpush1.bf16.msra.mxu0 0
    %160 = vmatprep.subr.bf16.mxu0 0
    %161 = vmatpush1.bf16.msra.mxu0 0
    %162 = vmatprep.subr.bf16.mxu0 0
    %163 = vmatpush1.bf16.msra.mxu0 0
    %164 = vmatprep.subr.bf16.mxu0 0
    %165 = vmatpush1.bf16.msra.mxu0 0
    %166 = vmatprep.subr.bf16.mxu0 0
    %167 = vmatpush1.bf16.msra.mxu0 0
    %168 = vmatprep.subr.bf16.mxu0 0
    %169 = vmatpush1.bf16.msra.mxu0 0
    %170 = vmatprep.subr.bf16.mxu0 0
    %171 = vmatpush1.bf16.msra.mxu0 0
    %172 = vmatprep.subr.bf16.mxu0 0
    %173 = vmatpush1.bf16.msra.mxu0 0
    %174 = vmatprep.mubr.bf16.mxu0 0
    %175 = vmatmul.mubr.bf16.gmra.mrb[0].mxu0 %v99
    %v176 = vpop.f32.mrb[0].mxu0
    %v177 = vadd.f32 0.0, %v176
    %v178 = vpop.f32.mrb[0].mxu0
    %v179 = vadd.f32 0.0, %v178
    %v180 = vpop.f32.mrb[0].mxu0
    %v181 = vpop.f32.mrb[0].mxu0
    %182 = vdwg.mxu0
    %v183 = vld [vmem:[%s3] sm:$0x3]
    %v185 = vlaneseq
    %v186 = vshrl.u32 %v185, 7
    %v187 = vsub.s32 0, %v186
    %v188 = vrot.slane %v183, %v187
    %v189 = vlaneseq
    %v190 = vshrl.u32 %v189, 7
    %v191 = vsub.s32 1, %v190
    %v192 = vrot.slane %v183, %v191
    %v195 = vadd.f32 %v136, %v188
    %v196 = vadd.f32 %v138, %v192
    %v197 = vmax.f32 %v195, 0.0
    %v198 = vmax.f32 %v196, 0.0
    %v199 = vpack.c.bf16 %v197, %v197
    %v200 = vpack.c.bf16 %v198, %v198
    %v201 = vld [vmem:[#allocation7] sm:$0xff]
    %v202 = vld [vmem:[#allocation7 + $0x8] sm:$0xff]
    %v203 = vld [vmem:[#allocation7 + $0x10] sm:$0xff]
    %v204 = vld [vmem:[#allocation7 + $0x18] sm:$0xff]
    %v205 = vld [vmem:[#allocation7 + $0x20] sm:$0xff]
    %v206 = vld [vmem:[#allocation7 + $0x28] sm:$0xff]
    %v207 = vld [vmem:[#allocation7 + $0x30] sm:$0xff]
    %v208 = vld [vmem:[#allocation7 + $0x38] sm:$0xff]
    %v209 = vld [vmem:[#allocation7 + $0x40] sm:$0xff]
    %v210 = vld [vmem:[#allocation7 + $0x48] sm:$0xff]
    %v211 = vld [vmem:[#allocation7 + $0x50] sm:$0xff]
    %v212 = vld [vmem:[#allocation7 + $0x58] sm:$0xff]
    %v213 = vld [vmem:[#allocation7 + $0x60] sm:$0xff]
    %v214 = vld [vmem:[#allocation7 + $0x68] sm:$0xff]
    %v215 = vld [vmem:[#allocation7 + $0x70] sm:$0xff]
    %v216 = vld [vmem:[#allocation7 + $0x78] sm:$0xff]
    %v217 = vld [vmem:[#allocation7 + $0x80] sm:$0xff]
    %v218 = vld [vmem:[#allocation7 + $0x88] sm:$0xff]
    %v219 = vld [vmem:[#allocation7 + $0x90] sm:$0xff]
    %v220 = vld [vmem:[#allocation7 + $0x98] sm:$0xff]
    %v221 = vld [vmem:[#allocation7 + $0xa0] sm:$0xff]
    %v222 = vld [vmem:[#allocation7 + $0xa8] sm:$0xff]
    %v223 = vld [vmem:[#allocation7 + $0xb0] sm:$0xff]
    %v224 = vld [vmem:[#allocation7 + $0xb8] sm:$0xff]
    %v225 = vld [vmem:[#allocation7 + $0xc0] sm:$0xff]
    %v226 = vld [vmem:[#allocation7 + $0xc8] sm:$0xff]
    %v227 = vld [vmem:[#allocation7 + $0xd0] sm:$0xff]
    %v228 = vld [vmem:[#allocation7 + $0xd8] sm:$0xff]
    %v229 = vld [vmem:[#allocation7 + $0xe0] sm:$0xff]
    %v230 = vld [vmem:[#allocation7 + $0xe8] sm:$0xff]
    %v231 = vld [vmem:[#allocation7 + $0xf0] sm:$0xff]
    %v232 = vld [vmem:[#allocation7 + $0xf8] sm:$0xff]
    %v265 = vunpack.c.l.b16 %v201
    %v266 = vunpack.c.h.b16 %v201
    %v267 = vunpack.c.l.b16 %v202
    %v268 = vunpack.c.h.b16 %v202
    %v269 = vunpack.c.l.b16 %v203
    %v270 = vunpack.c.h.b16 %v203
    %v271 = vunpack.c.l.b16 %v204
    %v272 = vunpack.c.h.b16 %v204
    %v273 = vunpack.c.l.b16 %v205
    %v274 = vunpack.c.h.b16 %v205
    %v275 = vunpack.c.l.b16 %v206
    %v276 = vunpack.c.h.b16 %v206
    %v277 = vunpack.c.l.b16 %v207
    %v278 = vunpack.c.h.b16 %v207
    %v279 = vunpack.c.l.b16 %v208
    %v280 = vunpack.c.h.b16 %v208
    %v281 = vunpack.c.l.b16 %v209
    %v282 = vunpack.c.h.b16 %v209
    %v283 = vunpack.c.l.b16 %v210
    %v284 = vunpack.c.h.b16 %v210
    %v285 = vunpack.c.l.b16 %v211
    %v286 = vunpack.c.h.b16 %v211
    %v287 = vunpack.c.l.b16 %v212
    %v288 = vunpack.c.h.b16 %v212
    %v289 = vunpack.c.l.b16 %v213
    %v290 = vunpack.c.h.b16 %v213
    %v291 = vunpack.c.l.b16 %v214
    %v292 = vunpack.c.h.b16 %v214
    %v293 = vunpack.c.l.b16 %v215
    %v294 = vunpack.c.h.b16 %v215
    %v295 = vunpack.c.l.b16 %v216
    %v296 = vunpack.c.h.b16 %v216
    %v297 = vunpack.c.l.b16 %v217
    %v298 = vunpack.c.h.b16 %v217
    %v299 = vunpack.c.l.b16 %v218
    %v300 = vunpack.c.h.b16 %v218
    %v301 = vunpack.c.l.b16 %v219
    %v302 = vunpack.c.h.b16 %v219
    %v303 = vunpack.c.l.b16 %v220
    %v304 = vunpack.c.h.b16 %v220
    %v305 = vunpack.c.l.b16 %v221
    %v306 = vunpack.c.h.b16 %v221
    %v307 = vunpack.c.l.b16 %v222
    %v308 = vunpack.c.h.b16 %v222
    %v309 = vunpack.c.l.b16 %v223
    %v310 = vunpack.c.h.b16 %v223
    %v311 = vunpack.c.l.b16 %v224
    %v312 = vunpack.c.h.b16 %v224
    %v313 = vunpack.c.l.b16 %v225
    %v314 = vunpack.c.h.b16 %v225
    %v315 = vunpack.c.l.b16 %v226
    %v316 = vunpack.c.h.b16 %v226
    %v317 = vunpack.c.l.b16 %v227
    %v318 = vunpack.c.h.b16 %v227
    %v319 = vunpack.c.l.b16 %v228
    %v320 = vunpack.c.h.b16 %v228
    %v321 = vunpack.c.l.b16 %v229
    %v322 = vunpack.c.h.b16 %v229
    %v323 = vunpack.c.l.b16 %v230
    %v324 = vunpack.c.h.b16 %v230
    %v325 = vunpack.c.l.b16 %v231
    %v326 = vunpack.c.h.b16 %v231
    %v327 = vunpack.c.l.b16 %v232
    %v328 = vunpack.c.h.b16 %v232
    %v329 = vpack.c.b16 %v267, %v265
    %v330 = vpack.c.b16 %v268, %v266
    %v331 = vpack.c.b16 %v271, %v269
    %v332 = vpack.c.b16 %v272, %v270
    %v333 = vpack.c.b16 %v275, %v273
    %v334 = vpack.c.b16 %v276, %v274
    %v335 = vpack.c.b16 %v279, %v277
    %v336 = vpack.c.b16 %v280, %v278
    %v337 = vpack.c.b16 %v283, %v281
    %v338 = vpack.c.b16 %v284, %v282
    %v339 = vpack.c.b16 %v287, %v285
    %v340 = vpack.c.b16 %v288, %v286
    %v341 = vpack.c.b16 %v291, %v289
    %v342 = vpack.c.b16 %v292, %v290
    %v343 = vpack.c.b16 %v295, %v293
    %v344 = vpack.c.b16 %v296, %v294
    %v345 = vpack.c.b16 %v299, %v297
    %v346 = vpack.c.b16 %v300, %v298
    %v347 = vpack.c.b16 %v303, %v301
    %v348 = vpack.c.b16 %v304, %v302
    %v349 = vpack.c.b16 %v307, %v305
    %v350 = vpack.c.b16 %v308, %v306
    %v351 = vpack.c.b16 %v311, %v309
    %v352 = vpack.c.b16 %v312, %v310
    %v353 = vpack.c.b16 %v315, %v313
    %v354 = vpack.c.b16 %v316, %v314
    %v355 = vpack.c.b16 %v319, %v317
    %v356 = vpack.c.b16 %v320, %v318
    %v357 = vpack.c.b16 %v323, %v321
    %v358 = vpack.c.b16 %v324, %v322
    %v359 = vpack.c.b16 %v327, %v325
    %v360 = vpack.c.b16 %v328, %v326
    %393 = vmatprep.subr.bf16.mxu0 %v330
    %394 = vmatpush1.bf16.msra.mxu0 %v329
    %395 = vmatprep.subr.bf16.mxu0 %v332
    %396 = vmatpush1.bf16.msra.mxu0 %v331
    %397 = vmatprep.subr.bf16.mxu0 %v334
    %398 = vmatpush1.bf16.msra.mxu0 %v333
    %399 = vmatprep.subr.bf16.mxu0 %v336
    %400 = vmatpush1.bf16.msra.mxu0 %v335
    %401 = vmatprep.subr.bf16.mxu0 %v338
    %402 = vmatpush1.bf16.msra.mxu0 %v337
    %403 = vmatprep.subr.bf16.mxu0 %v340
    %404 = vmatpush1.bf16.msra.mxu0 %v339
    %405 = vmatprep.subr.bf16.mxu0 %v342
    %406 = vmatpush1.bf16.msra.mxu0 %v341
    %407 = vmatprep.subr.bf16.mxu0 %v344
    %408 = vmatpush1.bf16.msra.mxu0 %v343
    %409 = vmatprep.subr.bf16.mxu0 %v346
    %410 = vmatpush1.bf16.msra.mxu0 %v345
    %411 = vmatprep.subr.bf16.mxu0 %v348
    %412 = vmatpush1.bf16.msra.mxu0 %v347
    %413 = vmatprep.subr.bf16.mxu0 %v350
    %414 = vmatpush1.bf16.msra.mxu0 %v349
    %415 = vmatprep.subr.bf16.mxu0 %v352
    %416 = vmatpush1.bf16.msra.mxu0 %v351
    %417 = vmatprep.subr.bf16.mxu0 %v354
    %418 = vmatpush1.bf16.msra.mxu0 %v353
    %419 = vmatprep.subr.bf16.mxu0 %v356
    %420 = vmatpush1.bf16.msra.mxu0 %v355
    %421 = vmatprep.subr.bf16.mxu0 %v358
    %422 = vmatpush1.bf16.msra.mxu0 %v357
    %423 = vmatprep.subr.bf16.mxu0 %v360
    %424 = vmatpush1.bf16.msra.mxu0 %v359
    %425 = vmatprep.mubr.bf16.mxu0 %v200
    %426 = vmatmul.mubr.bf16.gmra.mrb[0].mxu0 %v199
    %v427 = vpop.f32.mrb[0].mxu0
    %v428 = vadd.f32 %v177, %v427
    %v429 = vpop.f32.mrb[0].mxu0
    %v430 = vadd.f32 %v179, %v429
    %v431 = vpop.f32.mrb[0].mxu0
    %v432 = vpop.f32.mrb[0].mxu0
    %433 = vdwg.mxu0
    %v434 = vld [vmem:[%s4] sm:$0x3]
    %v436 = vlaneseq
    %v437 = vshrl.u32 %v436, 7
    %v438 = vsub.s32 0, %v437
    %v439 = vrot.slane %v434, %v438
    %v440 = vlaneseq
    %v441 = vshrl.u32 %v440, 7
    %v442 = vsub.s32 1, %v441
    %v443 = vrot.slane %v434, %v442
    %v446 = vadd.f32 %v428, %v439
    %v447 = vadd.f32 %v430, %v443
    %v448 = vmax.f32 %v446, 0.0
    %v449 = vmax.f32 %v447, 0.0
    %v450 = vld [vmem:[%s5] sm:$0x3]
    %v452 = vlaneseq
    %v453 = vshrl.u32 %v452, 7
    %v454 = vsub.s32 0, %v453
    %v455 = vrot.slane %v450, %v454
    %v456 = vlaneseq
    %v457 = vshrl.u32 %v456, 7
    %v458 = vsub.s32 1, %v457
    %v459 = vrot.slane %v450, %v458
    %v462 = vmul.f32 %v448, %v455
    %v463 = vmul.f32 %v449, %v459
    %v464 = vadd.f32 %v462, %v463
    %465 = vadd.xlane.f32.xlu0 %v464
    %v466 = vpop.xlane.xlu0 %465
    %v467 = vld [vmem:[%s6] sm:$0x1]
    %v469 = vlaneseq
    %v470 = vshrl.u32 %v469, 7
    %v471 = vsub.s32 0, %v470
    %v472 = vrot.slane %v467, %v471
    %v474 = vmul.f32 %v71, %v472
    %v475 = vsel %vm97, %v474, 0.0
    %476 = vadd.xlane.f32.xlu0 %v475
    %v477 = vpop.xlane.xlu0 %476
    %v478 = vadd.f32 %v466, %v477
    %v479 = vld [vmem:[#allocation2] sm:$0x1]
    %v481 = vlaneseq
    %v482 = vshrl.u32 %v481, 7
    %v483 = vsub.s32 0, %v482
    %v484 = vrot.slane %v479, %v483
    %v486 = vadd.f32 %v478, %v484
    %vm487 = vcmask 7168
    %488 = vst.msk [vmem:[%s8] sm:$0xff] %vm487, %v486
    // Predicated region
    $region46: #{tpu_custom_call.1} parent=1 // pred_check
      _
    $region47: #{tpu_custom_call.1} parent=1 // pred_check_branch
      %490 = sbr.rel (0) target = $region49
    $region48: #{tpu_custom_call.1} parent=1 // pred_region
      _
    $region49: #{tpu_custom_call.1} parent=1 // pred_fallthru
      _
    // Predicated region
    $region50: #{tpu_custom_call.1} parent=1 // pred_check
      _
    $region51: #{tpu_custom_call.1} parent=1 // pred_check_branch
      %492 = sbr.rel (0) target = $region53
    $region52: #{tpu_custom_call.1} parent=1 // pred_region
      _
    $region53: #{tpu_custom_call.1} parent=1 // pred_fallthru
      _
    %493 = vsyncpa [#allocation4], 1
    %494 = vsyncpa [#allocation6], 1

</llo_original>
